<compile_context>
chip_gen: v7x
topology: tpu7x:2x2x1
jax: 0.10.0
libtpu: 0.0.40
codegen_flags: <defaults>
</compile_context>

<pallas_src>
import jax
import jax.numpy as jnp
from jax import lax
from jax.experimental import pallas as pl
from jax.experimental.pallas import tpu as pltpu


def _value_mlp_kernel(x_ref, w1_ref, b1_ref, w2_ref, b2_ref, w3t_ref, b3_ref, o_ref):
    # x: (TB, obs) f32; w1/w2: bf16; b1/b2: f32; w3t: (1, H2) f32; b3: SMEM scalar.
    x = x_ref[...].astype(jnp.bfloat16)

    # Layer 1: bf16 MXU matmul, f32 accumulation, bias + ReLU on the VPU.
    h1 = jnp.dot(x, w1_ref[...], preferred_element_type=jnp.float32) + b1_ref[...]
    h1 = jnp.maximum(h1, 0.0).astype(jnp.bfloat16)                 # (TB, H1)

    # Layer 2: same pattern.
    h2 = jnp.dot(h1, w2_ref[...], preferred_element_type=jnp.float32) + b2_ref[...]
    h2 = jnp.maximum(h2, 0.0)                                      # (TB, H2) f32

    # Layer 3: contract H2 between w3^T (1, H2) and h2 (TB, H2) -> (1, TB).
    # Produces a lane-dense row directly, so the output store is unmasked.
    out_row = lax.dot_general(
        w3t_ref[...], h2,
        dimension_numbers=(((1,), (1,)), ((), ())),
        preferred_element_type=jnp.float32,
    )                                                              # (1, TB)
    o_ref[...] = out_row + b3_ref[0, 0]


def value_network_forward(observation, params, *, batch_tile=256):
    """Pallas implementation of ValueNetwork.forward.

    observation: (B, obs_dim) float32
    params: dict with w1 (obs,H1), b1 (1,H1), w2 (H1,H2), b2 (1,H2),
            w3 (H2,1), b3 (1,1)  -- weights stored transposed vs. torch.
    returns: (B, 1) float32
    """
    observation = observation.astype(jnp.float32)
    w1 = params["w1"].astype(jnp.bfloat16)
    b1 = params["b1"].astype(jnp.float32)
    w2 = params["w2"].astype(jnp.bfloat16)
    b2 = params["b2"].astype(jnp.float32)
    w3t = params["w3"].astype(jnp.float32).T                # (1, H2)
    b3 = params["b3"].astype(jnp.float32).reshape(1, 1)     # SMEM scalar

    B, obs_dim = observation.shape
    H1 = w1.shape[1]
    H2 = w2.shape[1]

    # Sublane-aligned batch tile. For small batches split into ~2 tiles so the
    # parallel grid axis still has >= 2 steps (keeps both v7x TCs busy).
    batch_tile = max(8, (batch_tile // 8) * 8)
    if B > batch_tile:
        tile = batch_tile
    else:
        tile = max(8, ((pl.cdiv(B, 2) + 7) // 8) * 8)
    num_tiles = pl.cdiv(B, tile)
    b_pad = num_tiles * tile
    if b_pad != B:
        observation = jnp.pad(observation, ((0, b_pad - B), (0, 0)))

    out = pl.pallas_call(
        _value_mlp_kernel,
        out_shape=jax.ShapeDtypeStruct((num_tiles, 1, tile), jnp.float32),
        grid=(num_tiles,),
        in_specs=[
            pl.BlockSpec((tile, obs_dim), lambda i: (i, 0)),        # x tile
            pl.BlockSpec((obs_dim, H1), lambda i: (0, 0)),          # w1 (resident, bf16)
            pl.BlockSpec((1, H1), lambda i: (0, 0)),                # b1
            pl.BlockSpec((H1, H2), lambda i: (0, 0)),               # w2 (resident, bf16)
            pl.BlockSpec((1, H2), lambda i: (0, 0)),                # b2
            pl.BlockSpec((1, H2), lambda i: (0, 0)),                # w3^T
            pl.BlockSpec(memory_space=pltpu.MemorySpace.SMEM),      # b3 scalar
        ],
        # Lane-dense (1, tile) row per grid step; leading tile index squeezed.
        out_specs=pl.BlockSpec((None, 1, tile), lambda i: (i, 0, 0)),
        compiler_params=pltpu.CompilerParams(
            dimension_semantics=("parallel",),
        ),
    )(observation, w1, b1, w2, b2, w3t, b3)

    return out.reshape(b_pad, 1)[:B]


def init_value_network_params(key, obs_dim, network_shape=(256, 256)):
    """Deterministic init mimicking torch.nn.Linear default U(-1/sqrt(fan_in), +)."""
    h1, h2 = network_shape
    k = jax.random.split(key, 6)

    def linear(kw, kb, fan_in, fan_out):
        bound = 1.0 / jnp.sqrt(float(fan_in))
        w = jax.random.uniform(kw, (fan_in, fan_out), jnp.float32, -bound, bound)
        b = jax.random.uniform(kb, (1, fan_out), jnp.float32, -bound, bound)
        return w, b

    w1, b1 = linear(k[0], k[1], obs_dim, h1)
    w2, b2 = linear(k[2], k[3], h1, h2)
    w3, b3 = linear(k[4], k[5], h2, 1)
    return {"w1": w1, "b1": b1, "w2": w2, "b2": b2, "w3": w3, "b3": b3}


def _reference_forward(observation, params):
    h1 = jnp.maximum(observation @ params["w1"] + params["b1"], 0.0)
    h2 = jnp.maximum(h1 @ params["w2"] + params["b2"], 0.0)
    return h2 @ params["w3"] + params["b3"]


if __name__ == "__main__":
    key = jax.random.PRNGKey(0)
    k_obs, k_params = jax.random.split(key)

    batch = 13          # deliberately not tile-aligned: exercises padding path
    obs_dim = 32
    network_shape = (256, 256)

    observation = jax.random.normal(k_obs, (batch, obs_dim), dtype=jnp.float32)
    params = init_value_network_params(k_params, obs_dim, network_shape)

    pred = value_network_forward(observation, params)
    pred = jax.block_until_ready(pred)

    ref = _reference_forward(observation, params)
    assert pred.shape == (batch, 1)
    # bf16 matmuls with f32 accumulation -> slightly looser tolerance than pure f32.
    assert jnp.allclose(pred, ref, atol=1e-2, rtol=1e-2), float(
        jnp.max(jnp.abs(pred - ref))
    )

    print("KERNEL_OK")
</pallas_src>

<mosaic_0001>
module attributes {stable_mosaic.version = 11 : i64} {
  func.func @_value_mlp_kernel(%arg0: i32, %arg1: memref<8x32xf32, #tpu.memory_space<vmem>>, %arg2: memref<32x256xbf16, #tpu.memory_space<vmem>>, %arg3: memref<1x256xf32, #tpu.memory_space<vmem>>, %arg4: memref<256x256xbf16, #tpu.memory_space<vmem>>, %arg5: memref<1x256xf32, #tpu.memory_space<vmem>>, %arg6: memref<1x256xf32, #tpu.memory_space<vmem>>, %arg7: memref<1x1xf32, #tpu.memory_space<smem>>, %arg8: memref<1x1x8xf32, #tpu.memory_space<vmem>>) attributes {dimension_semantics = [#tpu.dimension_semantics<parallel>], iteration_bounds = array<i64: 2>, scalar_prefetch = 0 : i64, scratch_operands = 0 : i64, tpu.core_type = #tpu.core_type<tc>, window_params = [{transform_indices = @transform_0, window_bounds = array<i64: 8, 32>}, {pipeline_mode = #tpu.pipeline_mode<synchronous>, transform_indices = @transform_1, window_bounds = array<i64: 32, 256>}, {pipeline_mode = #tpu.pipeline_mode<synchronous>, transform_indices = @transform_2, window_bounds = array<i64: 1, 256>}, {pipeline_mode = #tpu.pipeline_mode<synchronous>, transform_indices = @transform_3, window_bounds = array<i64: 256, 256>}, {pipeline_mode = #tpu.pipeline_mode<synchronous>, transform_indices = @transform_4, window_bounds = array<i64: 1, 256>}, {pipeline_mode = #tpu.pipeline_mode<synchronous>, transform_indices = @transform_5, window_bounds = array<i64: 1, 256>}, {transform_indices = @transform_6, window_bounds = array<i64: 1, 1>}, {transform_indices = @transform_7, window_bounds = array<i64: 1, 1, 8>}]} {
    %c0 = arith.constant 0 : index
    %c0_0 = arith.constant 0 : index
    %0 = vector.load %arg1[%c0, %c0_0] : memref<8x32xf32, #tpu.memory_space<vmem>>, vector<8x32xf32>
    %1 = arith.truncf %0 : vector<8x32xf32> to vector<8x32xbf16>
    %c0_1 = arith.constant 0 : index
    %c0_2 = arith.constant 0 : index
    %2 = vector.load %arg2[%c0_1, %c0_2] : memref<32x256xbf16, #tpu.memory_space<vmem>>, vector<32x256xbf16>
    %cst = arith.constant dense<0.000000e+00> : vector<8x256xf32>
    %3 = tpu.matmul %1, %2, %cst {dimension_numbers = #tpu.dot_dimension_numbers<[1], [0], [0], [1], [0, 0, 1, 1], [], []>} : vector<8x32xbf16>, vector<32x256xbf16>, vector<8x256xf32> -> vector<8x256xf32>
    %c0_3 = arith.constant 0 : index
    %c0_4 = arith.constant 0 : index
    %4 = vector.load %arg3[%c0_3, %c0_4] : memref<1x256xf32, #tpu.memory_space<vmem>>, vector<1x256xf32>
    %5 = vector.broadcast %4 : vector<1x256xf32> to vector<8x256xf32>
    %6 = arith.addf %3, %5 : vector<8x256xf32>
    %cst_5 = arith.constant 0.000000e+00 : f32
    %7 = vector.broadcast %cst_5 : f32 to vector<8x256xf32>
    %8 = arith.maximumf %6, %7 : vector<8x256xf32>
    %9 = arith.truncf %8 : vector<8x256xf32> to vector<8x256xbf16>
    %c0_6 = arith.constant 0 : index
    %c0_7 = arith.constant 0 : index
    %10 = vector.load %arg4[%c0_6, %c0_7] : memref<256x256xbf16, #tpu.memory_space<vmem>>, vector<256x256xbf16>
    %cst_8 = arith.constant dense<0.000000e+00> : vector<8x256xf32>
    %11 = tpu.matmul %9, %10, %cst_8 {dimension_numbers = #tpu.dot_dimension_numbers<[1], [0], [0], [1], [0, 0, 1, 1], [], []>} : vector<8x256xbf16>, vector<256x256xbf16>, vector<8x256xf32> -> vector<8x256xf32>
    %c0_9 = arith.constant 0 : index
    %c0_10 = arith.constant 0 : index
    %12 = vector.load %arg5[%c0_9, %c0_10] : memref<1x256xf32, #tpu.memory_space<vmem>>, vector<1x256xf32>
    %13 = vector.broadcast %12 : vector<1x256xf32> to vector<8x256xf32>
    %14 = arith.addf %11, %13 : vector<8x256xf32>
    %cst_11 = arith.constant 0.000000e+00 : f32
    %15 = vector.broadcast %cst_11 : f32 to vector<8x256xf32>
    %16 = arith.maximumf %14, %15 : vector<8x256xf32>
    %c0_12 = arith.constant 0 : index
    %c0_13 = arith.constant 0 : index
    %17 = vector.load %arg6[%c0_12, %c0_13] : memref<1x256xf32, #tpu.memory_space<vmem>>, vector<1x256xf32>
    %cst_14 = arith.constant dense<0.000000e+00> : vector<1x8xf32>
    %18 = tpu.matmul %17, %16, %cst_14 {dimension_numbers = #tpu.dot_dimension_numbers<[1], [1], [0], [0], [0, 0, 1, 0], [], []>} : vector<1x256xf32>, vector<8x256xf32>, vector<1x8xf32> -> vector<1x8xf32>
    %c0_15 = arith.constant 0 : index
    %c0_16 = arith.constant 0 : index
    %19 = memref.load %arg7[%c0_15, %c0_16] : memref<1x1xf32, #tpu.memory_space<smem>>
    %20 = vector.broadcast %19 : f32 to vector<1x8xf32>
    %21 = arith.addf %18, %20 : vector<1x8xf32>
    %c0_17 = arith.constant 0 : index
    %c0_18 = arith.constant 0 : index
    %c0_19 = arith.constant 0 : index
    %22 = vector.load %arg8[%c0_17, %c0_18, %c0_19] : memref<1x1x8xf32, #tpu.memory_space<vmem>>, vector<1x1x8xf32>
    %23 = vector.shape_cast %22 : vector<1x1x8xf32> to vector<1x8xf32>
    %24 = vector.shape_cast %21 : vector<1x8xf32> to vector<1x1x8xf32>
    tpu.vector_store %arg8[%c0_17, %c0_18, %c0_19], %24 {strides = array<i32>} : memref<1x1x8xf32, #tpu.memory_space<vmem>>, vector<1x1x8xf32>,
    return
  }
  func.func @transform_0(%arg0: i32) -> (i32, i32) {
    %c0_i32 = arith.constant 0 : i32
    %c0_i32_0 = arith.constant 0 : i32
    return %arg0, %c0_i32 : i32, i32
  }
  func.func @transform_1(%arg0: i32) -> (i32, i32) {
    %c0_i32 = arith.constant 0 : i32
    %c0_i32_0 = arith.constant 0 : i32
    %c0_i32_1 = arith.constant 0 : i32
    return %c0_i32, %c0_i32_0 : i32, i32
  }
  func.func @transform_2(%arg0: i32) -> (i32, i32) {
    %c0_i32 = arith.constant 0 : i32
    %c0_i32_0 = arith.constant 0 : i32
    %c0_i32_1 = arith.constant 0 : i32
    return %c0_i32, %c0_i32_0 : i32, i32
  }
  func.func @transform_3(%arg0: i32) -> (i32, i32) {
    %c0_i32 = arith.constant 0 : i32
    %c0_i32_0 = arith.constant 0 : i32
    %c0_i32_1 = arith.constant 0 : i32
    return %c0_i32, %c0_i32_0 : i32, i32
  }
  func.func @transform_4(%arg0: i32) -> (i32, i32) {
    %c0_i32 = arith.constant 0 : i32
    %c0_i32_0 = arith.constant 0 : i32
    %c0_i32_1 = arith.constant 0 : i32
    return %c0_i32, %c0_i32_0 : i32, i32
  }
  func.func @transform_5(%arg0: i32) -> (i32, i32) {
    %c0_i32 = arith.constant 0 : i32
    %c0_i32_0 = arith.constant 0 : i32
    %c0_i32_1 = arith.constant 0 : i32
    return %c0_i32, %c0_i32_0 : i32, i32
  }
  func.func @transform_6(%arg0: i32) -> (i32, i32) {
    %c0_i32 = arith.constant 0 : i32
    %c0_i32_0 = arith.constant 0 : i32
    %c0_i32_1 = arith.constant 0 : i32
    return %c0_i32, %c0_i32_0 : i32, i32
  }
  func.func @transform_7(%arg0: i32) -> (i32, i32, i32) {
    %c0_i32 = arith.constant 0 : i32
    %c0_i32_0 = arith.constant 0 : i32
    %c0_i32_1 = arith.constant 0 : i32
    return %arg0, %c0_i32, %c0_i32_0 : i32, i32, i32
  }
}

</mosaic_0001>

<llo_original>
// kernel: tpu_custom_call.1
$region0: #{tpu_custom_call.1}
  #allocation0 [shape = 'u32[]', space=smem, size = 0x4, offset = 0x4, fixed_abs, tag = 'smem constant byte address 0x4 - core index']
  #allocation1 [shape = 'u32[144,128]{1,0:T(1,128)}', space=vmem, size = 0x12000, scoped, tag = 'internal scratch']
  #allocation2 [shape = 'f32[1,1]{1,0:T(1,128)S(6)}', space=smem, size = 0x200, scoped, tag = 'scoped memory for tpu_custom_call.1']
  %s0 = inlined_call_operand.hbm [shape: f32[16,32], index: 0, kind: input, shape index: {}]
  %s1 = inlined_call_operand.hbm [shape: bf16[32,256], index: 1, kind: input, shape index: {}]
  %s2 = inlined_call_operand.vmem [shape: f32[1,256], index: 2, kind: input, shape index: {}]
  %s3 = inlined_call_operand.hbm [shape: bf16[256,256], index: 3, kind: input, shape index: {}]
  %s4 = inlined_call_operand.vmem [shape: f32[1,256], index: 4, kind: input, shape index: {}]
  %s5 = inlined_call_operand.vmem [shape: f32[1,256], index: 5, kind: input, shape index: {}]
  %s6 = inlined_call_operand.<no memory space> [shape: f32[1,1], index: 6, kind: input, shape index: {}]
  %s7 = inlined_call_operand.hbm [shape: f32[2,1,8], index: 7, kind: output, shape index: {}]
  %s8 = sld [smem:[#allocation0]]
  $region73: #{tpu_custom_call.1} parent=0
    _
  %s10 = ssub.s32 1, %s8
  %s11 = scalar_select 0, %s10, %s8
  %12 = sst [smem:[#allocation2]] %s6
  $region1: #{tpu_custom_call.1} parent=0
    #allocation3 [shape = 'u8[8192]{0}', space=vmem, size = 0x2000, scoped, tag = 'input window, operand 0']
    #allocation4 [shape = 's32[2]{0}', space=sflag, size = 0x8, scoped, tag = 'scoped memory for tpu_custom_call.1']
    #allocation5 [shape = 's32[2]{0}', space=sflag, size = 0x8, scoped, tag = 'scoped memory for tpu_custom_call.1']
    #allocation6 [shape = 'u8[16384]{0}', space=vmem, size = 0x4000, scoped, tag = 'input window, operand 1, single buffered']
    #allocation7 [shape = 's32[1]{0}', space=sflag, size = 0x4, scoped, tag = 'scoped memory for tpu_custom_call.1']
    #allocation8 [shape = 'u8[131072]{0}', space=vmem, size = 0x20000, scoped, tag = 'input window, operand 3, single buffered']
    #allocation9 [shape = 'u8[1024]{0}', space=vmem, size = 0x400, scoped, tag = 'output window, operand 0']
    %13 = vsyncpa [#allocation4], 0
    %s14 = scalar_lea.sflag [#allocation4], 1
    %15 = vsyncpa %s14, 0
    %16 = vsyncpa [#allocation7], 0
    %17 = vsyncpa [#allocation5], 0
    %s18 = scalar_lea.sflag [#allocation5], 1
    %19 = vsyncpa %s18, 0
    loop: start=0, step=1, limit=4
    $region2: #{tpu_custom_call.1} parent=1 // loop_pre_header
      _
    $region3: #{tpu_custom_call.1} parent=1 // loop_header
      %s21 = sphi 0, %s25
      %p22 = scmp.ge.s32.totalorder %s21, 4
      %s31 = sphi 0, %s33
      %s34 = sphi 0, %s31
      %s35 = sphi 0, %s34
      %s51 = sphi 0, %s35
      %s55 = sphi 0, %s55
      %s57 = sphi 0, %s55
      %s58 = sphi 0, %s57
      %s72 = sphi 0, %s58
      %s76 = sphi 0, %s76
      %s78 = sphi 0, %s76
      %s79 = sphi 0, %s78
      %s93 = sphi 0, %s79
      %s97 = sphi 0, %s97
      %s99 = sphi 0, %s97
      %s100 = sphi 0, %s99
      %s114 = sphi 0, %s100
      %s118 = sphi 0, %s118
      %s120 = sphi 0, %s118
      %s121 = sphi 0, %s120
      %s135 = sphi 0, %s121
      %s139 = sphi 0, %s139
      %s141 = sphi 0, %s139
      %s142 = sphi 0, %s141
      %s156 = sphi 0, %s142
      %s160 = sphi 0, %s160
      %s162 = sphi 0, %s160
      %s163 = sphi 0, %s162
      %s177 = sphi 0, %s163
      %s183 = sphi 0, %s185
      %s186 = sphi 0, %s183
      %s187 = sphi 0, %s186
      %s203 = sphi 0, %s187
    $region4: #{tpu_custom_call.1} parent=1 // loop_header_branch
      %24 = sbr.rel (%p22) target = $region8
    $region5: #{tpu_custom_call.1} parent=1 // loop_body
      %s26 = ssub.s32 %s21, 1
      %s27 = ssub.s32 %s21, 2
      %s28 = sadd.s32 %s21, 1
      %s29 = ssub.s32 %s21, %s28
      %p30 = scmp.eq.s32.totalorder %s29, 0
      %s32 = sadd.s32 %s31, 1
      %s33 = scalar_select %p30, %s31, %s32
      %p36 = pneg %p30
      %p37 = scmp.eq.s32.totalorder %s21, 1
      %p38 = por %p36, %p37
      %p39 = scmp.ne.s32.totalorder %s31, %s34
      %p40 = scmp.eq.s32.totalorder %s21, 0
      %p41 = por %p39, %p40
      %p42 = scmp.ne.s32.totalorder %s31, %s34
      %p43 = scmp.eq.s32.totalorder %s26, 1
      %p44 = por %p42, %p43
      %p45 = scmp.ne.s32.totalorder %s34, %s35
      %p46 = scmp.eq.s32.totalorder %s26, 0
      %p47 = por %p45, %p46
      %p48 = scmp.ne.s32.totalorder %s34, %s35
      %p49 = scmp.eq.s32.totalorder %s27, 1
      %p50 = por %p48, %p49
      %p52 = scmp.ne.s32.totalorder %s35, %s51
      %p53 = scmp.eq.s32.totalorder %s27, 0
      %p54 = por %p52, %p53
      %s56 = sadd.s32 %s55, 1
      %p59 = scmp.eq.s32.totalorder %s21, 1
      %p60 = scmp.ne.s32.totalorder %s55, %s57
      %p61 = scmp.eq.s32.totalorder %s21, 0
      %p62 = por %p60, %p61
      %p63 = scmp.ne.s32.totalorder %s55, %s57
      %p64 = scmp.eq.s32.totalorder %s26, 1
      %p65 = por %p63, %p64
      %p66 = scmp.ne.s32.totalorder %s57, %s58
      %p67 = scmp.eq.s32.totalorder %s26, 0
      %p68 = por %p66, %p67
      %p69 = scmp.ne.s32.totalorder %s57, %s58
      %p70 = scmp.eq.s32.totalorder %s27, 1
      %p71 = por %p69, %p70
      %p73 = scmp.ne.s32.totalorder %s58, %s72
      %p74 = scmp.eq.s32.totalorder %s27, 0
      %p75 = por %p73, %p74
      %s77 = sadd.s32 %s76, 1
      %p80 = scmp.eq.s32.totalorder %s21, 1
      %p81 = scmp.ne.s32.totalorder %s76, %s78
      %p82 = scmp.eq.s32.totalorder %s21, 0
      %p83 = por %p81, %p82
      %p84 = scmp.ne.s32.totalorder %s76, %s78
      %p85 = scmp.eq.s32.totalorder %s26, 1
      %p86 = por %p84, %p85
      %p87 = scmp.ne.s32.totalorder %s78, %s79
      %p88 = scmp.eq.s32.totalorder %s26, 0
      %p89 = por %p87, %p88
      %p90 = scmp.ne.s32.totalorder %s78, %s79
      %p91 = scmp.eq.s32.totalorder %s27, 1
      %p92 = por %p90, %p91
      %p94 = scmp.ne.s32.totalorder %s79, %s93
      %p95 = scmp.eq.s32.totalorder %s27, 0
      %p96 = por %p94, %p95
      %s98 = sadd.s32 %s97, 1
      %p101 = scmp.eq.s32.totalorder %s21, 1
      %p102 = scmp.ne.s32.totalorder %s97, %s99
      %p103 = scmp.eq.s32.totalorder %s21, 0
      %p104 = por %p102, %p103
      %p105 = scmp.ne.s32.totalorder %s97, %s99
      %p106 = scmp.eq.s32.totalorder %s26, 1
      %p107 = por %p105, %p106
      %p108 = scmp.ne.s32.totalorder %s99, %s100
      %p109 = scmp.eq.s32.totalorder %s26, 0
      %p110 = por %p108, %p109
      %p111 = scmp.ne.s32.totalorder %s99, %s100
      %p112 = scmp.eq.s32.totalorder %s27, 1
      %p113 = por %p111, %p112
      %p115 = scmp.ne.s32.totalorder %s100, %s114
      %p116 = scmp.eq.s32.totalorder %s27, 0
      %p117 = por %p115, %p116
      %s119 = sadd.s32 %s118, 1
      %p122 = scmp.eq.s32.totalorder %s21, 1
      %p123 = scmp.ne.s32.totalorder %s118, %s120
      %p124 = scmp.eq.s32.totalorder %s21, 0
      %p125 = por %p123, %p124
      %p126 = scmp.ne.s32.totalorder %s118, %s120
      %p127 = scmp.eq.s32.totalorder %s26, 1
      %p128 = por %p126, %p127
      %p129 = scmp.ne.s32.totalorder %s120, %s121
      %p130 = scmp.eq.s32.totalorder %s26, 0
      %p131 = por %p129, %p130
      %p132 = scmp.ne.s32.totalorder %s120, %s121
      %p133 = scmp.eq.s32.totalorder %s27, 1
      %p134 = por %p132, %p133
      %p136 = scmp.ne.s32.totalorder %s121, %s135
      %p137 = scmp.eq.s32.totalorder %s27, 0
      %p138 = por %p136, %p137
      %s140 = sadd.s32 %s139, 1
      %p143 = scmp.eq.s32.totalorder %s21, 1
      %p144 = scmp.ne.s32.totalorder %s139, %s141
      %p145 = scmp.eq.s32.totalorder %s21, 0
      %p146 = por %p144, %p145
      %p147 = scmp.ne.s32.totalorder %s139, %s141
      %p148 = scmp.eq.s32.totalorder %s26, 1
      %p149 = por %p147, %p148
      %p150 = scmp.ne.s32.totalorder %s141, %s142
      %p151 = scmp.eq.s32.totalorder %s26, 0
      %p152 = por %p150, %p151
      %p153 = scmp.ne.s32.totalorder %s141, %s142
      %p154 = scmp.eq.s32.totalorder %s27, 1
      %p155 = por %p153, %p154
      %p157 = scmp.ne.s32.totalorder %s142, %s156
      %p158 = scmp.eq.s32.totalorder %s27, 0
      %p159 = por %p157, %p158
      %s161 = sadd.s32 %s160, 1
      %p164 = scmp.eq.s32.totalorder %s21, 1
      %p165 = scmp.ne.s32.totalorder %s160, %s162
      %p166 = scmp.eq.s32.totalorder %s21, 0
      %p167 = por %p165, %p166
      %p168 = scmp.ne.s32.totalorder %s160, %s162
      %p169 = scmp.eq.s32.totalorder %s26, 1
      %p170 = por %p168, %p169
      %p171 = scmp.ne.s32.totalorder %s162, %s163
      %p172 = scmp.eq.s32.totalorder %s26, 0
      %p173 = por %p171, %p172
      %p174 = scmp.ne.s32.totalorder %s162, %s163
      %p175 = scmp.eq.s32.totalorder %s27, 1
      %p176 = por %p174, %p175
      %p178 = scmp.ne.s32.totalorder %s163, %s177
      %p179 = scmp.eq.s32.totalorder %s27, 0
      %p180 = por %p178, %p179
      %s181 = ssub.s32 %s21, %s28
      %p182 = scmp.eq.s32.totalorder %s181, 0
      %s184 = sadd.s32 %s183, 1
      %s185 = scalar_select %p182, %s183, %s184
      %p188 = pneg %p182
      %p189 = scmp.eq.s32.totalorder %s21, 1
      %p190 = por %p188, %p189
      %p191 = scmp.ne.s32.totalorder %s183, %s186
      %p192 = scmp.eq.s32.totalorder %s21, 0
      %p193 = por %p191, %p192
      %p194 = scmp.ne.s32.totalorder %s183, %s186
      %p195 = scmp.eq.s32.totalorder %s26, 1
      %p196 = por %p194, %p195
      %p197 = scmp.ne.s32.totalorder %s186, %s187
      %p198 = scmp.eq.s32.totalorder %s26, 0
      %p199 = por %p197, %p198
      %p200 = scmp.ne.s32.totalorder %s186, %s187
      %p201 = scmp.eq.s32.totalorder %s27, 1
      %p202 = por %p200, %p201
      %p204 = scmp.ne.s32.totalorder %s187, %s203
      %p205 = scmp.eq.s32.totalorder %s27, 0
      %p206 = por %p204, %p205
      %p207 = scmp.le.s32.totalorder 1, %s21
      %p208 = scmp.lt.s32.totalorder %s21, 3
      %p209 = pnand %p207, %p208
      %p210 = pneg %p209
      // Predicated region
      $region9: #{tpu_custom_call.1} parent=5 // pred_check
        _
      $region10: #{tpu_custom_call.1} parent=5 // pred_check_branch
        %212 = sbr.rel (%p209) target = $region12
      $region11: #{tpu_custom_call.1} parent=5 // pred_region
        %s213 = ssub.s32 %s21, 1
        // Predicated region
        $region13: #{tpu_custom_call.1} parent=11 // pred_check
          %p214 = pneg %p68
        $region14: #{tpu_custom_call.1} parent=11 // pred_check_branch
          %216 = sbr.rel (%p214) target = $region16
        $region15: #{tpu_custom_call.1} parent=11 // pred_region
          %s218 = ssub.s32 512, 512
          %219 = vsyncadd [#allocation7], %s218
          %s220 = sshll.u32 [#allocation6], 4
          %s221 = int_to_ptr.vmem [resolvable:$true] %s220
          %226 = dma.hbm_to_vmem [thread:$0]  %s1, 512, %s221, [#allocation7], 128, 128, 8
        $region16: #{tpu_custom_call.1} parent=11 // pred_fallthru
          _
        // Predicated region
        $region17: #{tpu_custom_call.1} parent=11 // pred_check
          %p227 = pneg %p89
        $region18: #{tpu_custom_call.1} parent=11 // pred_check_branch
          %229 = sbr.rel (%p227) target = $region20
        $region19: #{tpu_custom_call.1} parent=11 // pred_region
          _
        $region20: #{tpu_custom_call.1} parent=11 // pred_fallthru
          _
        // Predicated region
        $region21: #{tpu_custom_call.1} parent=11 // pred_check
          %p230 = pneg %p110
        $region22: #{tpu_custom_call.1} parent=11 // pred_check_branch
          %232 = sbr.rel (%p230) target = $region24
        $region23: #{tpu_custom_call.1} parent=11 // pred_region
          %s234 = ssub.s32 4096, 4096
          %235 = vsyncadd [#allocation7], %s234
          %s236 = sshll.u32 [#allocation8], 4
          %s237 = int_to_ptr.vmem [resolvable:$true] %s236
          %242 = dma.hbm_to_vmem [thread:$0]  %s3, 4096, %s237, [#allocation7], 128, 128, 8
        $region24: #{tpu_custom_call.1} parent=11 // pred_fallthru
          _
        // Predicated region
        $region25: #{tpu_custom_call.1} parent=11 // pred_check
          %p243 = pneg %p131
        $region26: #{tpu_custom_call.1} parent=11 // pred_check_branch
          %245 = sbr.rel (%p243) target = $region28
        $region27: #{tpu_custom_call.1} parent=11 // pred_region
          _
        $region28: #{tpu_custom_call.1} parent=11 // pred_fallthru
          _
        // Predicated region
        $region29: #{tpu_custom_call.1} parent=11 // pred_check
          %p246 = pneg %p152
        $region30: #{tpu_custom_call.1} parent=11 // pred_check_branch
          %248 = sbr.rel (%p246) target = $region32
        $region31: #{tpu_custom_call.1} parent=11 // pred_region
          _
        $region32: #{tpu_custom_call.1} parent=11 // pred_fallthru
          _
        // Predicated region
        $region33: #{tpu_custom_call.1} parent=11 // pred_check
          %p249 = pneg %p173
        $region34: #{tpu_custom_call.1} parent=11 // pred_check_branch
          %251 = sbr.rel (%p249) target = $region36
        $region35: #{tpu_custom_call.1} parent=11 // pred_region
          _
        $region36: #{tpu_custom_call.1} parent=11 // pred_fallthru
          _
      $region12: #{tpu_custom_call.1} parent=5 // pred_fallthru
        _
      %p252 = scmp.lt.s32.totalorder %s21, 2
      // Predicated region
      $region37: #{tpu_custom_call.1} parent=5 // pred_check
        %p253 = pneg %p252
      $region38: #{tpu_custom_call.1} parent=5 // pred_check_branch
        %255 = sbr.rel (%p253) target = $region40
      $region39: #{tpu_custom_call.1} parent=5 // pred_region
        // Predicated region
        $region41: #{tpu_custom_call.1} parent=39 // pred_check
          %p256 = pneg %p41
        $region42: #{tpu_custom_call.1} parent=39 // pred_check_branch
          %258 = sbr.rel (%p256) target = $region44
        $region43: #{tpu_custom_call.1} parent=39 // pred_region
          %s259 = sand.u32 %s31, 1
          %s260 = scalar_lea.sflag [#allocation4], %s259
          %s261 = sand.u32 %s31, 1
          %s262 = smul.addr %s261, 8
          %s263 = scalar_lea.vmem [#allocation3], %s262
          %s265 = ssub.s32 128, 128
          %266 = vsyncadd %s260, %s265
          %s267 = smul.addr %s21, 128
          %s268 = scalar_lea.hbm %s0, %s267
          %s270 = sshll.u32 %s263, 4
          %s271 = int_to_ptr.vmem [resolvable:$true] %s270
          %273 = dma.hbm_to_vmem [thread:$0]  %s268, 128, %s271, %s260
        $region44: #{tpu_custom_call.1} parent=39 // pred_fallthru
          _
      $region40: #{tpu_custom_call.1} parent=5 // pred_fallthru
        _
      %p274 = scmp.le.s32.totalorder 1, %s21
      %p275 = scmp.lt.s32.totalorder %s21, 3
      %p276 = pnand %p274, %p275
      %p277 = pneg %p276
      // Predicated region
      $region45: #{tpu_custom_call.1} parent=5 // pred_check
        _
      $region46: #{tpu_custom_call.1} parent=5 // pred_check_branch
        %279 = sbr.rel (%p276) target = $region48
      $region47: #{tpu_custom_call.1} parent=5 // pred_region
        %s280 = ssub.s32 %s21, 1
        %s281 = sand.u32 %s34, 1
        %s282 = scalar_lea.sflag [#allocation4], %s281
        %s283 = sand.u32 %s34, 1
        %s284 = smul.addr %s283, 8
        %s285 = scalar_lea.vmem [#allocation3], %s284
        // Predicated region
        $region49: #{tpu_custom_call.1} parent=47 // pred_check
          %p286 = pneg %p47
        $region50: #{tpu_custom_call.1} parent=47 // pred_check_branch
          %288 = sbr.rel (%p286) target = $region52
        $region51: #{tpu_custom_call.1} parent=47 // pred_region
          %289 = dma.done %s282, 128
        $region52: #{tpu_custom_call.1} parent=47 // pred_fallthru
          _
        // Predicated region
        $region53: #{tpu_custom_call.1} parent=47 // pred_check
          %p290 = pneg %p68
        $region54: #{tpu_custom_call.1} parent=47 // pred_check_branch
          %292 = sbr.rel (%p290) target = $region56
        $region55: #{tpu_custom_call.1} parent=47 // pred_region
          %293 = dma.done [#allocation7], 512
        $region56: #{tpu_custom_call.1} parent=47 // pred_fallthru
          _
        // Predicated region
        $region57: #{tpu_custom_call.1} parent=47 // pred_check
          %p294 = pneg %p110
        $region58: #{tpu_custom_call.1} parent=47 // pred_check_branch
          %296 = sbr.rel (%p294) target = $region60
        $region59: #{tpu_custom_call.1} parent=47 // pred_region
          %297 = dma.done [#allocation7], 4096
        $region60: #{tpu_custom_call.1} parent=47 // pred_fallthru
          _
        %s298 = sand.u32 %s34, 1
        %s299 = scalar_lea.sflag [#allocation4], %s298
        %s300 = sand.u32 %s34, 1
        %s301 = smul.addr %s300, 8
        %s302 = scalar_lea.vmem [#allocation3], %s301
        %p303 = pneg %p47
        %p304 = pneg %p44
        %p305 = pneg %p68
        %p306 = pneg %p65
        %p307 = pneg %p89
        %p308 = pneg %p86
        %p309 = pneg %p110
        %p310 = pneg %p107
        %p311 = pneg %p131
        %p312 = pneg %p128
        %p313 = pneg %p152
        %p314 = pneg %p149
        %p315 = pneg %p173
        %p316 = pneg %p170
        %p317 = pneg %p199
        %p318 = pneg %p196
        %s319 = sand.u32 %s186, 1
        %s320 = scalar_lea.sflag [#allocation5], %s319
        %s321 = sand.u32 %s186, 1
        %s322 = scalar_lea.vmem [#allocation9], %s321
        %v324 = vld [vmem:[%s285] sm:$0xff]
        %v325 = vpack.c.bf16 %v324, %v324
        %v326 = vld [vmem:[#allocation6] sm:$0xff]
        %v327 = vld [vmem:[#allocation6 + $0x8] sm:$0xff]
        %v328 = vld [vmem:[#allocation6 + $0x10] sm:$0xff]
        %v329 = vld [vmem:[#allocation6 + $0x18] sm:$0xff]
        %v330 = vld [vmem:[%s2] sm:$0x3]
        %v332 = vlaneseq
        %v333 = vshrl.u32 %v332, 7
        %v334 = vsub.s32 0, %v333
        %v335 = vrot.slane %v330, %v334
        %v336 = vlaneseq
        %v337 = vshrl.u32 %v336, 7
        %v338 = vsub.s32 1, %v337
        %v339 = vrot.slane %v330, %v338
        %v346 = vunpack.c.l.b16 %v326
        %v347 = vunpack.c.h.b16 %v326
        %v348 = vunpack.c.l.b16 %v327
        %v349 = vunpack.c.h.b16 %v327
        %v350 = vunpack.c.l.b16 %v328
        %v351 = vunpack.c.h.b16 %v328
        %v352 = vunpack.c.l.b16 %v329
        %v353 = vunpack.c.h.b16 %v329
        %v354 = vpack.c.b16 %v348, %v346
        %v355 = vpack.c.b16 %v349, %v347
        %v356 = vpack.c.b16 %v352, %v350
        %v357 = vpack.c.b16 %v353, %v351
        %vm362 = vcmask 261120
        %v364 = vsel %vm362, %v325, 0
        %366 = vmatprep.subr.bf16.mxu0 %v355
        %367 = vmatpush1.bf16.msra.mxu0 %v354
        %368 = vmatprep.subr.bf16.mxu0 %v357
        %369 = vmatpush1.bf16.msra.mxu0 %v356
        %370 = vmatprep.subr.bf16.mxu0 0
        %371 = vmatpush1.bf16.msra.mxu0 0
        %372 = vmatprep.subr.bf16.mxu0 0
        %373 = vmatpush1.bf16.msra.mxu0 0
        %374 = vmatprep.subr.bf16.mxu0 0
        %375 = vmatpush1.bf16.msra.mxu0 0
        %376 = vmatprep.subr.bf16.mxu0 0
        %377 = vmatpush1.bf16.msra.mxu0 0
        %378 = vmatprep.subr.bf16.mxu0 0
        %379 = vmatpush1.bf16.msra.mxu0 0
        %380 = vmatprep.subr.bf16.mxu0 0
        %381 = vmatpush1.bf16.msra.mxu0 0
        %382 = vmatprep.subr.bf16.mxu0 0
        %383 = vmatpush1.bf16.msra.mxu0 0
        %384 = vmatprep.subr.bf16.mxu0 0
        %385 = vmatpush1.bf16.msra.mxu0 0
        %386 = vmatprep.subr.bf16.mxu0 0
        %387 = vmatpush1.bf16.msra.mxu0 0
        %388 = vmatprep.subr.bf16.mxu0 0
        %389 = vmatpush1.bf16.msra.mxu0 0
        %390 = vmatprep.subr.bf16.mxu0 0
        %391 = vmatpush1.bf16.msra.mxu0 0
        %392 = vmatprep.subr.bf16.mxu0 0
        %393 = vmatpush1.bf16.msra.mxu0 0
        %394 = vmatprep.subr.bf16.mxu0 0
        %395 = vmatpush1.bf16.msra.mxu0 0
        %396 = vmatprep.subr.bf16.mxu0 0
        %397 = vmatpush1.bf16.msra.mxu0 0
        %398 = vmatprep.mubr.bf16.mxu0 0
        %399 = vmatmul.mubr.bf16.gmra.mrb[0].mxu0 %v364
        %v400 = vpop.f32.mrb[0].mxu0
        %v401 = vadd.f32 %v335, %v400
        %v402 = vpop.f32.mrb[0].mxu0
        %v403 = vadd.f32 %v339, %v402
        %v404 = vpop.f32.mrb[0].mxu0
        %v405 = vpop.f32.mrb[0].mxu0
        %406 = vdwg.mxu0
        %v407 = vmax.f32 %v401, 0.0
        %v408 = vmax.f32 %v403, 0.0
        %v409 = vpack.c.bf16 %v407, %v407
        %v410 = vpack.c.bf16 %v408, %v408
        %v411 = vld [vmem:[#allocation8] sm:$0xff]
        %v412 = vld [vmem:[#allocation8 + $0x8] sm:$0xff]
        %v413 = vld [vmem:[#allocation8 + $0x10] sm:$0xff]
        %v414 = vld [vmem:[#allocation8 + $0x18] sm:$0xff]
        %v415 = vld [vmem:[#allocation8 + $0x20] sm:$0xff]
        %v416 = vld [vmem:[#allocation8 + $0x28] sm:$0xff]
        %v417 = vld [vmem:[#allocation8 + $0x30] sm:$0xff]
        %v418 = vld [vmem:[#allocation8 + $0x38] sm:$0xff]
        %v419 = vld [vmem:[#allocation8 + $0x40] sm:$0xff]
        %v420 = vld [vmem:[#allocation8 + $0x48] sm:$0xff]
        %v421 = vld [vmem:[#allocation8 + $0x50] sm:$0xff]
        %v422 = vld [vmem:[#allocation8 + $0x58] sm:$0xff]
        %v423 = vld [vmem:[#allocation8 + $0x60] sm:$0xff]
        %v424 = vld [vmem:[#allocation8 + $0x68] sm:$0xff]
        %v425 = vld [vmem:[#allocation8 + $0x70] sm:$0xff]
        %v426 = vld [vmem:[#allocation8 + $0x78] sm:$0xff]
        %v427 = vld [vmem:[#allocation8 + $0x80] sm:$0xff]
        %v428 = vld [vmem:[#allocation8 + $0x88] sm:$0xff]
        %v429 = vld [vmem:[#allocation8 + $0x90] sm:$0xff]
        %v430 = vld [vmem:[#allocation8 + $0x98] sm:$0xff]
        %v431 = vld [vmem:[#allocation8 + $0xa0] sm:$0xff]
        %v432 = vld [vmem:[#allocation8 + $0xa8] sm:$0xff]
        %v433 = vld [vmem:[#allocation8 + $0xb0] sm:$0xff]
        %v434 = vld [vmem:[#allocation8 + $0xb8] sm:$0xff]
        %v435 = vld [vmem:[#allocation8 + $0xc0] sm:$0xff]
        %v436 = vld [vmem:[#allocation8 + $0xc8] sm:$0xff]
        %v437 = vld [vmem:[#allocation8 + $0xd0] sm:$0xff]
        %v438 = vld [vmem:[#allocation8 + $0xd8] sm:$0xff]
        %v439 = vld [vmem:[#allocation8 + $0xe0] sm:$0xff]
        %v440 = vld [vmem:[#allocation8 + $0xe8] sm:$0xff]
        %v441 = vld [vmem:[#allocation8 + $0xf0] sm:$0xff]
        %v442 = vld [vmem:[#allocation8 + $0xf8] sm:$0xff]
        %v443 = vld [vmem:[%s4] sm:$0x3]
        %v445 = vlaneseq
        %v446 = vshrl.u32 %v445, 7
        %v447 = vsub.s32 0, %v446
        %v448 = vrot.slane %v443, %v447
        %v449 = vlaneseq
        %v450 = vshrl.u32 %v449, 7
        %v451 = vsub.s32 1, %v450
        %v452 = vrot.slane %v443, %v451
        %v487 = vunpack.c.l.b16 %v411
        %v488 = vunpack.c.h.b16 %v411
        %v489 = vunpack.c.l.b16 %v412
        %v490 = vunpack.c.h.b16 %v412
        %v491 = vunpack.c.l.b16 %v413
        %v492 = vunpack.c.h.b16 %v413
        %v493 = vunpack.c.l.b16 %v414
        %v494 = vunpack.c.h.b16 %v414
        %v495 = vunpack.c.l.b16 %v415
        %v496 = vunpack.c.h.b16 %v415
        %v497 = vunpack.c.l.b16 %v416
        %v498 = vunpack.c.h.b16 %v416
        %v499 = vunpack.c.l.b16 %v417
        %v500 = vunpack.c.h.b16 %v417
        %v501 = vunpack.c.l.b16 %v418
        %v502 = vunpack.c.h.b16 %v418
        %v503 = vunpack.c.l.b16 %v419
        %v504 = vunpack.c.h.b16 %v419
        %v505 = vunpack.c.l.b16 %v420
        %v506 = vunpack.c.h.b16 %v420
        %v507 = vunpack.c.l.b16 %v421
        %v508 = vunpack.c.h.b16 %v421
        %v509 = vunpack.c.l.b16 %v422
        %v510 = vunpack.c.h.b16 %v422
        %v511 = vunpack.c.l.b16 %v423
        %v512 = vunpack.c.h.b16 %v423
        %v513 = vunpack.c.l.b16 %v424
        %v514 = vunpack.c.h.b16 %v424
        %v515 = vunpack.c.l.b16 %v425
        %v516 = vunpack.c.h.b16 %v425
        %v517 = vunpack.c.l.b16 %v426
        %v518 = vunpack.c.h.b16 %v426
        %v519 = vunpack.c.l.b16 %v427
        %v520 = vunpack.c.h.b16 %v427
        %v521 = vunpack.c.l.b16 %v428
        %v522 = vunpack.c.h.b16 %v428
        %v523 = vunpack.c.l.b16 %v429
        %v524 = vunpack.c.h.b16 %v429
        %v525 = vunpack.c.l.b16 %v430
        %v526 = vunpack.c.h.b16 %v430
        %v527 = vunpack.c.l.b16 %v431
        %v528 = vunpack.c.h.b16 %v431
        %v529 = vunpack.c.l.b16 %v432
        %v530 = vunpack.c.h.b16 %v432
        %v531 = vunpack.c.l.b16 %v433
        %v532 = vunpack.c.h.b16 %v433
        %v533 = vunpack.c.l.b16 %v434
        %v534 = vunpack.c.h.b16 %v434
        %v535 = vunpack.c.l.b16 %v435
        %v536 = vunpack.c.h.b16 %v435
        %v537 = vunpack.c.l.b16 %v436
        %v538 = vunpack.c.h.b16 %v436
        %v539 = vunpack.c.l.b16 %v437
        %v540 = vunpack.c.h.b16 %v437
        %v541 = vunpack.c.l.b16 %v438
        %v542 = vunpack.c.h.b16 %v438
        %v543 = vunpack.c.l.b16 %v439
        %v544 = vunpack.c.h.b16 %v439
        %v545 = vunpack.c.l.b16 %v440
        %v546 = vunpack.c.h.b16 %v440
        %v547 = vunpack.c.l.b16 %v441
        %v548 = vunpack.c.h.b16 %v441
        %v549 = vunpack.c.l.b16 %v442
        %v550 = vunpack.c.h.b16 %v442
        %v551 = vpack.c.b16 %v489, %v487
        %v552 = vpack.c.b16 %v490, %v488
        %v553 = vpack.c.b16 %v493, %v491
        %v554 = vpack.c.b16 %v494, %v492
        %v555 = vpack.c.b16 %v497, %v495
        %v556 = vpack.c.b16 %v498, %v496
        %v557 = vpack.c.b16 %v501, %v499
        %v558 = vpack.c.b16 %v502, %v500
        %v559 = vpack.c.b16 %v505, %v503
        %v560 = vpack.c.b16 %v506, %v504
        %v561 = vpack.c.b16 %v509, %v507
        %v562 = vpack.c.b16 %v510, %v508
        %v563 = vpack.c.b16 %v513, %v511
        %v564 = vpack.c.b16 %v514, %v512
        %v565 = vpack.c.b16 %v517, %v515
        %v566 = vpack.c.b16 %v518, %v516
        %v567 = vpack.c.b16 %v521, %v519
        %v568 = vpack.c.b16 %v522, %v520
        %v569 = vpack.c.b16 %v525, %v523
        %v570 = vpack.c.b16 %v526, %v524
        %v571 = vpack.c.b16 %v529, %v527
        %v572 = vpack.c.b16 %v530, %v528
        %v573 = vpack.c.b16 %v533, %v531
        %v574 = vpack.c.b16 %v534, %v532
        %v575 = vpack.c.b16 %v537, %v535
        %v576 = vpack.c.b16 %v538, %v536
        %v577 = vpack.c.b16 %v541, %v539
        %v578 = vpack.c.b16 %v542, %v540
        %v579 = vpack.c.b16 %v545, %v543
        %v580 = vpack.c.b16 %v546, %v544
        %v581 = vpack.c.b16 %v549, %v547
        %v582 = vpack.c.b16 %v550, %v548
        %615 = vmatprep.subr.bf16.mxu0 %v552
        %616 = vmatpush1.bf16.msra.mxu0 %v551
        %617 = vmatprep.subr.bf16.mxu0 %v554
        %618 = vmatpush1.bf16.msra.mxu0 %v553
        %619 = vmatprep.subr.bf16.mxu0 %v556
        %620 = vmatpush1.bf16.msra.mxu0 %v555
        %621 = vmatprep.subr.bf16.mxu0 %v558
        %622 = vmatpush1.bf16.msra.mxu0 %v557
        %623 = vmatprep.subr.bf16.mxu0 %v560
        %624 = vmatpush1.bf16.msra.mxu0 %v559
        %625 = vmatprep.subr.bf16.mxu0 %v562
        %626 = vmatpush1.bf16.msra.mxu0 %v561
        %627 = vmatprep.subr.bf16.mxu0 %v564
        %628 = vmatpush1.bf16.msra.mxu0 %v563
        %629 = vmatprep.subr.bf16.mxu0 %v566
        %630 = vmatpush1.bf16.msra.mxu0 %v565
        %631 = vmatprep.subr.bf16.mxu0 %v568
        %632 = vmatpush1.bf16.msra.mxu0 %v567
        %633 = vmatprep.subr.bf16.mxu0 %v570
        %634 = vmatpush1.bf16.msra.mxu0 %v569
        %635 = vmatprep.subr.bf16.mxu0 %v572
        %636 = vmatpush1.bf16.msra.mxu0 %v571
        %637 = vmatprep.subr.bf16.mxu0 %v574
        %638 = vmatpush1.bf16.msra.mxu0 %v573
        %639 = vmatprep.subr.bf16.mxu0 %v576
        %640 = vmatpush1.bf16.msra.mxu0 %v575
        %641 = vmatprep.subr.bf16.mxu0 %v578
        %642 = vmatpush1.bf16.msra.mxu0 %v577
        %643 = vmatprep.subr.bf16.mxu0 %v580
        %644 = vmatpush1.bf16.msra.mxu0 %v579
        %645 = vmatprep.subr.bf16.mxu0 %v582
        %646 = vmatpush1.bf16.msra.mxu0 %v581
        %647 = vmatprep.mubr.bf16.mxu0 %v410
        %648 = vmatmul.mubr.bf16.gmra.mrb[0].mxu0 %v409
        %v649 = vpop.f32.mrb[0].mxu0
        %v650 = vadd.f32 %v448, %v649
        %v651 = vpop.f32.mrb[0].mxu0
        %v652 = vadd.f32 %v452, %v651
        %v653 = vpop.f32.mrb[0].mxu0
        %v654 = vpop.f32.mrb[0].mxu0
        %655 = vdwg.mxu0
        %v656 = vmax.f32 %v650, 0.0
        %v657 = vmax.f32 %v652, 0.0
        %v658 = vld [vmem:[%s5] sm:$0x3]
        %s659 = sld [smem:[#allocation2]]
        %v660 = vstv %s659
        %v662 = vlaneseq
        %v663 = vshrl.u32 %v662, 7
        %v664 = vsub.s32 0, %v663
        %v665 = vrot.slane %v658, %v664
        %v666 = vlaneseq
        %v667 = vshrl.u32 %v666, 7
        %v668 = vsub.s32 1, %v667
        %v669 = vrot.slane %v658, %v668
        %672 = vmatprep.subr.mxu0 %v657
        %673 = vmatpush1.xpose.msra.mxu0 %v656
        %674 = vmatprep.subr.mxu0 0.0
        %675 = vmatpush1.xpose.msra.mxu0 0.0
        %676 = vmatprep.subr.mxu0 0.0
        %677 = vmatpush1.xpose.msra.mxu0 0.0
        %678 = vmatprep.subr.mxu0 0.0
        %679 = vmatpush1.xpose.msra.mxu0 0.0
        %680 = vmatprep.subr.mxu0 0.0
        %681 = vmatpush1.xpose.msra.mxu0 0.0
        %682 = vmatprep.subr.mxu0 0.0
        %683 = vmatpush1.xpose.msra.mxu0 0.0
        %684 = vmatprep.subr.mxu0 0.0
        %685 = vmatpush1.xpose.msra.mxu0 0.0
        %686 = vmatprep.subr.mxu0 0.0
        %687 = vmatpush1.xpose.msra.mxu0 0.0
        %688 = vmatprep.subr.mxu0 0.0
        %689 = vmatpush1.xpose.msra.mxu0 0.0
        %690 = vmatprep.subr.mxu0 0.0
        %691 = vmatpush1.xpose.msra.mxu0 0.0
        %692 = vmatprep.subr.mxu0 0.0
        %693 = vmatpush1.xpose.msra.mxu0 0.0
        %694 = vmatprep.subr.mxu0 0.0
        %695 = vmatpush1.xpose.msra.mxu0 0.0
        %696 = vmatprep.subr.mxu0 0.0
        %697 = vmatpush1.xpose.msra.mxu0 0.0
        %698 = vmatprep.subr.mxu0 0.0
        %699 = vmatpush1.xpose.msra.mxu0 0.0
        %700 = vmatprep.subr.mxu0 0.0
        %701 = vmatpush1.xpose.msra.mxu0 0.0
        %702 = vmatprep.subr.mxu0 0.0
        %703 = vmatpush1.xpose.msra.mxu0 0.0
        %704 = vmatprep.subr.mxu0 0.0
        %705 = vmatpush1.xpose.msra.mxu0 0.0
        %706 = vmatprep.subr.mxu0 0.0
        %707 = vmatpush1.xpose.msra.mxu0 0.0
        %708 = vmatprep.subr.mxu0 0.0
        %709 = vmatpush1.xpose.msra.mxu0 0.0
        %710 = vmatprep.subr.mxu0 0.0
        %711 = vmatpush1.xpose.msra.mxu0 0.0
        %712 = vmatprep.subr.mxu0 0.0
        %713 = vmatpush1.xpose.msra.mxu0 0.0
        %714 = vmatprep.subr.mxu0 0.0
        %715 = vmatpush1.xpose.msra.mxu0 0.0
        %716 = vmatprep.subr.mxu0 0.0
        %717 = vmatpush1.xpose.msra.mxu0 0.0
        %718 = vmatprep.subr.mxu0 0.0
        %719 = vmatpush1.xpose.msra.mxu0 0.0
        %720 = vmatprep.subr.mxu0 0.0
        %721 = vmatpush1.xpose.msra.mxu0 0.0
        %722 = vmatprep.subr.mxu0 0.0
        %723 = vmatpush1.xpose.msra.mxu0 0.0
        %724 = vmatprep.subr.mxu0 0.0
        %725 = vmatpush1.xpose.msra.mxu0 0.0
        %726 = vmatprep.subr.mxu0 0.0
        %727 = vmatpush1.xpose.msra.mxu0 0.0
        %728 = vmatprep.subr.mxu0 0.0
        %729 = vmatpush1.xpose.msra.mxu0 0.0
        %730 = vmatprep.subr.mxu0 0.0
        %731 = vmatpush1.xpose.msra.mxu0 0.0
        %732 = vmatprep.subr.mxu0 0.0
        %733 = vmatpush1.xpose.msra.mxu0 0.0
        %734 = vmatprep.subr.mxu0 0.0
        %735 = vmatpush1.xpose.msra.mxu0 0.0
        %736 = vmatprep.mubr.f32.mxu0 %v669
        %737 = vmatmul.mubr.f32.gmra.mrb[0].mxu0 %v665
        %v738 = vpop.f32.mrb[0].mxu0
        %v739 = vadd.f32 %v660, %v738
        %v740 = vpop.f32.mrb[0].mxu0
        %741 = vdwg.mxu0
        %vm742 = vcmask 57344
        %743 = vst.msk [vmem:[%s322] sm:$0x1] %vm742, %v739
        %s744 = sand.u32 %s186, 1
        %s745 = scalar_lea.sflag [#allocation5], %s744
        %s746 = sand.u32 %s186, 1
        %s747 = scalar_lea.vmem [#allocation9], %s746
        // Predicated region
        $region61: #{tpu_custom_call.1} parent=47 // pred_check
          %p748 = pneg %p196
        $region62: #{tpu_custom_call.1} parent=47 // pred_check_branch
          %750 = sbr.rel (%p748) target = $region64
        $region63: #{tpu_custom_call.1} parent=47 // pred_region
          %s752 = ssub.s32 16, 16
          %753 = vsyncadd %s745, %s752
          %s754 = smul.addr %s26, 16
          %s755 = scalar_lea.hbm %s7, %s754
          %s757 = sshll.u32 %s747, 4
          %s758 = int_to_ptr.vmem [resolvable:$true] %s757
          %760 = dma.vmem_to_hbm [thread:$0]  %s758, 16, %s755, %s745
        $region64: #{tpu_custom_call.1} parent=47 // pred_fallthru
          _
      $region48: #{tpu_custom_call.1} parent=5 // pred_fallthru
        _
      %p761 = scmp.le.s32.totalorder 2, %s21
      // Predicated region
      $region65: #{tpu_custom_call.1} parent=5 // pred_check
        %p762 = pneg %p761
      $region66: #{tpu_custom_call.1} parent=5 // pred_check_branch
        %764 = sbr.rel (%p762) target = $region68
      $region67: #{tpu_custom_call.1} parent=5 // pred_region
        %s765 = ssub.s32 %s21, 2
        // Predicated region
        $region69: #{tpu_custom_call.1} parent=67 // pred_check
          %p766 = pneg %p202
        $region70: #{tpu_custom_call.1} parent=67 // pred_check_branch
          %768 = sbr.rel (%p766) target = $region72
        $region71: #{tpu_custom_call.1} parent=67 // pred_region
          %s769 = sand.u32 %s187, 1
          %s770 = scalar_lea.sflag [#allocation5], %s769
          %s771 = sand.u32 %s187, 1
          %s772 = scalar_lea.vmem [#allocation9], %s771
          %773 = dma.done %s770, 16
        $region72: #{tpu_custom_call.1} parent=67 // pred_fallthru
          _
      $region68: #{tpu_custom_call.1} parent=5 // pred_fallthru
        _
    $region6: #{tpu_custom_call.1} parent=1 // loop_footer
      %s25 = sadd.s32 1, %s21
    $region7: #{tpu_custom_call.1} parent=1 // loop_footer_branch
      %20 = sbr.rel target = $region3
    $region8: #{tpu_custom_call.1} parent=1 // loop_exit
      _
    %774 = vsyncpa [#allocation4], 1
    %s775 = scalar_lea.sflag [#allocation4], 1
    %776 = vsyncpa %s775, 1
    %777 = vsyncpa [#allocation7], 1
    %778 = vsyncpa [#allocation5], 1
    %s779 = scalar_lea.sflag [#allocation5], 1
    %780 = vsyncpa %s779, 1

</llo_original>
